<compile_context>
chip_gen: v7x
topology: tpu7x:2x2x1
jax: 0.10.0
libtpu: 0.0.40
codegen_flags: <defaults>
</compile_context>

<pallas_src>
import math
import functools

import jax
import jax.numpy as jnp
from jax.experimental import pallas as pl
from jax.experimental.pallas import tpu as pltpu


def _bahdanau_kernel(qp_ref, ref_ref, wrT_ref, br_ref, v_ref,
                     refproj_ref, logits_ref, *, use_tanh, C):
    # qp_ref:      (tB, H)      query already projected by W_query (+ bias) in the wrapper
    # ref_ref:     (tB, tS, H)  raw ref tile
    # wrT_ref:     (H, H)       Conv1d(k=1) weight, pre-transposed (Wr^T)
    # br_ref:      (1, H)       Conv1d bias
    # v_ref:       (1, H)       V vector
    # refproj_ref: (tB, tS, H)  Conv1d output tile (module returns this, permuted outside)
    # logits_ref:  (tB, tS)     attention logits tile (lane-dense)
    tB, tS, H = ref_ref.shape

    # Conv1d(H, H, k=1) over the hidden dim == one (tB*tS, H) @ (H, H) MXU matmul.
    r2 = ref_ref[...].reshape(tB * tS, H)
    rp2 = jnp.dot(r2, wrT_ref[...], preferred_element_type=jnp.float32) + br_ref[...]
    rp = rp2.reshape(tB, tS, H)

    refproj_ref[...] = rp.astype(refproj_ref.dtype)

    # tanh(q_proj + ref_proj) (EUP), then contract with V over the hidden dim (VPU + XLU).
    t = jnp.tanh(rp + qp_ref[...][:, None, :])                      # (tB, tS, H)
    logits = jnp.sum(t * v_ref[...].reshape(1, 1, H), axis=-1)      # (tB, tS)

    if use_tanh:
        logits = C * jnp.tanh(logits)

    logits_ref[...] = logits.astype(logits_ref.dtype)


def _choose_tiles(B, S, H, itemsize, vmem_budget_bytes):
    """Pick (tB, tS) obeying the (8,128)/full-dim rule and a VMEM budget.

    The budget accounts for double-buffered streaming blocks, resident params, and the
    f32 in-kernel temporaries (rp and the tanh intermediate).
    """
    def total_bytes(tb, ts):
        blk = (tb * ts * H * itemsize       # ref tile (in)
               + tb * ts * H * itemsize     # projected-ref tile (out)
               + tb * ts * 4                # logits tile (out, f32)
               + tb * H * 4)                # q_proj tile (in, f32)
        params = H * H * itemsize + 2 * H * itemsize    # Wr^T, br, V (resident)
        temps = 2 * tb * ts * H * 4                     # f32 rp + tanh intermediates
        return 2 * blk + params + temps

    # Sequence tile: full S, or a multiple of 128 dividing S (keeps the logits store
    # lane-dense and satisfies the (8,128) rule on the ref tile sublane dim). Largest first.
    ts_cands = [S] + [k * 128 for k in range(S // 128, 0, -1) if k * 128 < S and S % (k * 128) == 0]
    # Batch tile: full B, or a multiple of 8 dividing B. Largest first.
    tb_cands = [B] + [k * 8 for k in range(B // 8, 0, -1) if k * 8 < B and B % (k * 8) == 0]

    for ts in ts_cands:          # prefer large tS (lane-dense stores, fewer grid steps)
        for tb in tb_cands:
            if total_bytes(tb, ts) <= vmem_budget_bytes:
                return tb, ts
    return tb_cands[-1], ts_cands[-1]


def attention_bahdanau(query, ref, wq, bq, wr, br, v, *, use_tanh=False, C=10.0,
                       vmem_budget_bytes=12 * 1024 * 1024):
    """query: [B, H], ref: [B, S, H].

    Returns (ref_proj [B, H, S], logits [B, S]) matching the PyTorch module
    (whose first return value is the Conv1d-projected, permuted ref).
    """
    B, S, H = ref.shape
    assert query.shape == (B, H)

    # Hoist the query projection: one well-shaped (B,H)x(H,H) matmul outside the kernel.
    qp = (jnp.dot(query, wq.T, preferred_element_type=jnp.float32)
          + bq).astype(jnp.float32)                                  # [B, H]

    wrT = jnp.transpose(wr)          # pre-transpose once; kernel does r @ WrT
    br2 = br.reshape(1, H)
    v2 = v.reshape(1, H)

    itemsize = jnp.dtype(ref.dtype).itemsize
    tB, tS = _choose_tiles(B, S, H, itemsize, vmem_budget_bytes)
    grid = (B // tB, S // tS)

    kernel = functools.partial(_bahdanau_kernel, use_tanh=use_tanh, C=float(C))

    grid_spec = pltpu.PrefetchScalarGridSpec(
        num_scalar_prefetch=0,
        grid=grid,
        in_specs=[
            pl.BlockSpec((tB, H), lambda ib, js: (ib, 0)),            # q_proj
            pl.BlockSpec((tB, tS, H), lambda ib, js: (ib, js, 0)),    # ref
            pl.BlockSpec((H, H), lambda ib, js: (0, 0)),              # Wr^T (resident)
            pl.BlockSpec((1, H), lambda ib, js: (0, 0)),              # br
            pl.BlockSpec((1, H), lambda ib, js: (0, 0)),              # V
        ],
        out_specs=[
            pl.BlockSpec((tB, tS, H), lambda ib, js: (ib, js, 0)),    # Conv1d output [B,S,H]
            pl.BlockSpec((tB, tS), lambda ib, js: (ib, js)),          # logits (lane-dense)
        ],
    )

    # Advisory cost estimate for the XLA scheduler.
    flops = 2 * B * S * H * H + 5 * B * S * H
    transcendentals = B * S * H + (B * S if use_tanh else 0)
    bytes_accessed = (2 * B * S * H * itemsize        # ref in + ref_proj out
                      + B * S * 4                     # logits out
                      + B * H * 4                     # q_proj in
                      + H * H * itemsize + 2 * H * itemsize)

    ref_proj_bsh, logits = pl.pallas_call(
        kernel,
        out_shape=(
            jax.ShapeDtypeStruct((B, S, H), ref.dtype),
            jax.ShapeDtypeStruct((B, S), jnp.float32),
        ),
        grid_spec=grid_spec,
        compiler_params=pltpu.CompilerParams(
            dimension_semantics=("parallel", "parallel")),
        cost_estimate=pl.CostEstimate(flops=flops,
                                      transcendentals=transcendentals,
                                      bytes_accessed=bytes_accessed),
    )(qp, ref, wrT, br2, v2)

    # PyTorch returns the Conv1d output in [B, H, S]; the permute is pure layout plumbing
    # and is left to XLA outside the kernel (avoids an in-kernel batched XLU transpose).
    ref_proj = jnp.transpose(ref_proj_bsh, (0, 2, 1))
    return ref_proj, logits


if __name__ == "__main__":
    B, S, H = 2, 8, 32
    key = jax.random.PRNGKey(0)
    ks = jax.random.split(key, 7)
    bound = 1.0 / math.sqrt(H)

    # Deterministic synthetic parameters (nn.Linear / nn.Conv1d(k=1) weight squeezed / V)
    wq = jax.random.uniform(ks[0], (H, H), jnp.float32, -bound, bound)
    bq = jax.random.uniform(ks[1], (H,), jnp.float32, -bound, bound)
    wr = jax.random.uniform(ks[2], (H, H), jnp.float32, -bound, bound)  # [H,H,1] squeezed
    br = jax.random.uniform(ks[3], (H,), jnp.float32, -bound, bound)
    v = jax.random.uniform(ks[4], (H,), jnp.float32, -bound, bound)

    query = jax.random.normal(ks[5], (B, H), jnp.float32)
    ref = jax.random.normal(ks[6], (B, S, H), jnp.float32)

    ref_out, logits = attention_bahdanau(query, ref, wq, bq, wr, br, v)
    ref_out, logits = jax.block_until_ready((ref_out, logits))

    # Pure-JAX reference (matches PyTorch: first return value is the Conv1d output).
    qp_ref = query @ wq.T + bq                                 # [B, H]
    rp_bso = jnp.einsum("bsh,oh->bso", ref, wr) + br            # [B, S, H]  (conv1d k=1)
    ref_expected = jnp.transpose(rp_bso, (0, 2, 1))             # [B, H, S]
    t_ref = jnp.tanh(qp_ref[:, None, :] + rp_bso)
    logits_expected = jnp.einsum("bsh,h->bs", t_ref, v)

    assert jnp.allclose(ref_out, ref_expected, atol=1e-5, rtol=1e-5), "projected ref mismatch"
    assert jnp.allclose(logits, logits_expected, atol=1e-5, rtol=1e-5), "logits mismatch"

    print("KERNEL_OK")
</pallas_src>

<mosaic_0001>
module attributes {stable_mosaic.version = 11 : i64} {
  func.func @_bahdanau_kernel(%arg0: i32, %arg1: i32, %arg2: memref<2x32xf32, #tpu.memory_space<vmem>>, %arg3: memref<2x8x32xf32, #tpu.memory_space<vmem>>, %arg4: memref<32x32xf32, #tpu.memory_space<vmem>>, %arg5: memref<1x32xf32, #tpu.memory_space<vmem>>, %arg6: memref<1x32xf32, #tpu.memory_space<vmem>>, %arg7: memref<2x8x32xf32, #tpu.memory_space<vmem>>, %arg8: memref<2x8xf32, #tpu.memory_space<vmem>>) attributes {dimension_semantics = [#tpu.dimension_semantics<parallel>, #tpu.dimension_semantics<parallel>], iteration_bounds = array<i64: 1, 1>, scalar_prefetch = 0 : i64, scratch_operands = 0 : i64, tpu.core_type = #tpu.core_type<tc>, window_params = [{transform_indices = @transform_0, window_bounds = array<i64: 2, 32>}, {transform_indices = @transform_1, window_bounds = array<i64: 2, 8, 32>}, {pipeline_mode = #tpu.pipeline_mode<synchronous>, transform_indices = @transform_2, window_bounds = array<i64: 32, 32>}, {pipeline_mode = #tpu.pipeline_mode<synchronous>, transform_indices = @transform_3, window_bounds = array<i64: 1, 32>}, {pipeline_mode = #tpu.pipeline_mode<synchronous>, transform_indices = @transform_4, window_bounds = array<i64: 1, 32>}, {transform_indices = @transform_5, window_bounds = array<i64: 2, 8, 32>}, {transform_indices = @transform_6, window_bounds = array<i64: 2, 8>}]} {
    %c0 = arith.constant 0 : index
    %c0_0 = arith.constant 0 : index
    %c0_1 = arith.constant 0 : index
    %0 = vector.load %arg3[%c0, %c0_0, %c0_1] : memref<2x8x32xf32, #tpu.memory_space<vmem>>, vector<2x8x32xf32>
    %1 = vector.shape_cast %0 : vector<2x8x32xf32> to vector<16x32xf32>
    %c0_2 = arith.constant 0 : index
    %c0_3 = arith.constant 0 : index
    %2 = vector.load %arg4[%c0_2, %c0_3] : memref<32x32xf32, #tpu.memory_space<vmem>>, vector<32x32xf32>
    %cst = arith.constant dense<0.000000e+00> : vector<16x32xf32>
    %3 = tpu.matmul %1, %2, %cst {dimension_numbers = #tpu.dot_dimension_numbers<[1], [0], [0], [1], [0, 0, 1, 1], [], []>} : vector<16x32xf32>, vector<32x32xf32>, vector<16x32xf32> -> vector<16x32xf32>
    %c0_4 = arith.constant 0 : index
    %c0_5 = arith.constant 0 : index
    %4 = vector.load %arg5[%c0_4, %c0_5] : memref<1x32xf32, #tpu.memory_space<vmem>>, vector<1x32xf32>
    %5 = vector.broadcast %4 : vector<1x32xf32> to vector<16x32xf32>
    %6 = arith.addf %3, %5 : vector<16x32xf32>
    %7 = vector.shape_cast %6 : vector<16x32xf32> to vector<2x8x32xf32>
    %c0_6 = arith.constant 0 : index
    %c0_7 = arith.constant 0 : index
    %c0_8 = arith.constant 0 : index
    %8 = vector.load %arg7[%c0_6, %c0_7, %c0_8] : memref<2x8x32xf32, #tpu.memory_space<vmem>>, vector<2x8x32xf32>
    tpu.vector_store %arg7[%c0_6, %c0_7, %c0_8], %7 {strides = array<i32>} : memref<2x8x32xf32, #tpu.memory_space<vmem>>, vector<2x8x32xf32>,
    %c0_9 = arith.constant 0 : index
    %c0_10 = arith.constant 0 : index
    %9 = vector.load %arg2[%c0_9, %c0_10] : memref<2x32xf32, #tpu.memory_space<vmem>>, vector<2x32xf32>
    %10 = vector.shape_cast %9 : vector<2x32xf32> to vector<2x1x32xf32>
    %11 = vector.broadcast %10 : vector<2x1x32xf32> to vector<2x8x32xf32>
    %12 = arith.addf %7, %11 : vector<2x8x32xf32>
    %13 = math.tanh %12 : vector<2x8x32xf32>
    %c0_11 = arith.constant 0 : index
    %c0_12 = arith.constant 0 : index
    %14 = vector.load %arg6[%c0_11, %c0_12] : memref<1x32xf32, #tpu.memory_space<vmem>>, vector<1x32xf32>
    %15 = vector.shape_cast %14 : vector<1x32xf32> to vector<1x1x32xf32>
    %16 = vector.broadcast %15 : vector<1x1x32xf32> to vector<2x8x32xf32>
    %17 = arith.mulf %13, %16 : vector<2x8x32xf32>
    %cst_13 = arith.constant dense<0.000000e+00> : vector<2x8xf32>
    %18 = vector.multi_reduction <add>, %17, %cst_13 [2] : vector<2x8x32xf32> to vector<2x8xf32>
    %c0_14 = arith.constant 0 : index
    %c0_15 = arith.constant 0 : index
    %19 = vector.load %arg8[%c0_14, %c0_15] : memref<2x8xf32, #tpu.memory_space<vmem>>, vector<2x8xf32>
    tpu.vector_store %arg8[%c0_14, %c0_15], %18 {strides = array<i32>} : memref<2x8xf32, #tpu.memory_space<vmem>>, vector<2x8xf32>,
    return
  }
  func.func @transform_0(%arg0: i32, %arg1: i32) -> (i32, i32) {
    %c0_i32 = arith.constant 0 : i32
    %c0_i32_0 = arith.constant 0 : i32
    return %arg0, %c0_i32 : i32, i32
  }
  func.func @transform_1(%arg0: i32, %arg1: i32) -> (i32, i32, i32) {
    %c0_i32 = arith.constant 0 : i32
    %c0_i32_0 = arith.constant 0 : i32
    return %arg0, %arg1, %c0_i32 : i32, i32, i32
  }
  func.func @transform_2(%arg0: i32, %arg1: i32) -> (i32, i32) {
    %c0_i32 = arith.constant 0 : i32
    %c0_i32_0 = arith.constant 0 : i32
    %c0_i32_1 = arith.constant 0 : i32
    return %c0_i32, %c0_i32_0 : i32, i32
  }
  func.func @transform_3(%arg0: i32, %arg1: i32) -> (i32, i32) {
    %c0_i32 = arith.constant 0 : i32
    %c0_i32_0 = arith.constant 0 : i32
    %c0_i32_1 = arith.constant 0 : i32
    return %c0_i32, %c0_i32_0 : i32, i32
  }
  func.func @transform_4(%arg0: i32, %arg1: i32) -> (i32, i32) {
    %c0_i32 = arith.constant 0 : i32
    %c0_i32_0 = arith.constant 0 : i32
    %c0_i32_1 = arith.constant 0 : i32
    return %c0_i32, %c0_i32_0 : i32, i32
  }
  func.func @transform_5(%arg0: i32, %arg1: i32) -> (i32, i32, i32) {
    %c0_i32 = arith.constant 0 : i32
    %c0_i32_0 = arith.constant 0 : i32
    return %arg0, %arg1, %c0_i32 : i32, i32, i32
  }
  func.func @transform_6(%arg0: i32, %arg1: i32) -> (i32, i32) {
    %c0_i32 = arith.constant 0 : i32
    return %arg0, %arg1 : i32, i32
  }
}

</mosaic_0001>

<llo_original>
// kernel: tpu_custom_call.1
$region0: #{tpu_custom_call.1}
  #allocation0 [shape = 'u32[]', space=smem, size = 0x4, offset = 0x4, fixed_abs, tag = 'smem constant byte address 0x4 - core index']
  #allocation1 [shape = 'u32[144,128]{1,0:T(1,128)}', space=vmem, size = 0x12000, scoped, tag = 'internal scratch']
  %s0 = inlined_call_operand.hbm [shape: f32[2,32], index: 0, kind: input, shape index: {}]
  %s1 = inlined_call_operand.hbm [shape: f32[2,8,32], index: 1, kind: input, shape index: {}]
  %s2 = inlined_call_operand.hbm [shape: f32[32,32], index: 2, kind: input, shape index: {}]
  %s3 = inlined_call_operand.vmem [shape: f32[1,32], index: 3, kind: input, shape index: {}]
  %s4 = inlined_call_operand.vmem [shape: f32[1,32], index: 4, kind: input, shape index: {}]
  %s5 = inlined_call_operand.hbm [shape: f32[2,8,32], index: 5, kind: output, shape index: {0}]
  %s6 = inlined_call_operand.hbm [shape: f32[2,8], index: 6, kind: output, shape index: {1}]
  %7 = xla_tuple %s5, %s6
  %s8 = sld [smem:[#allocation0]]
  $region50: #{tpu_custom_call.1} parent=0
    _
  %s10 = ssub.s32 1, %s8
  %s11 = scalar_select 0, %s10, %s8
  $region1: #{tpu_custom_call.1} parent=0
    #allocation2 [shape = 'u8[1024]{0}', space=vmem, size = 0x400, scoped, tag = 'input window, operand 0, single buffered']
    #allocation3 [shape = 's32[1]{0}', space=sflag, size = 0x4, scoped, tag = 'scoped memory for tpu_custom_call.1']
    #allocation4 [shape = 's32[1]{0}', space=sflag, size = 0x4, scoped, tag = 'scoped memory for tpu_custom_call.1']
    #allocation5 [shape = 'u8[8192]{0}', space=vmem, size = 0x2000, scoped, tag = 'input window, operand 1, single buffered']
    #allocation6 [shape = 's32[1]{0}', space=sflag, size = 0x4, scoped, tag = 'scoped memory for tpu_custom_call.1']
    #allocation7 [shape = 'u8[16384]{0}', space=vmem, size = 0x4000, scoped, tag = 'input window, operand 2, single buffered']
    #allocation8 [shape = 'u8[8192]{0}', space=vmem, size = 0x2000, scoped, tag = 'output window, operand 0, single buffered']
    #allocation9 [shape = 'u8[1024]{0}', space=vmem, size = 0x400, scoped, tag = 'output window, operand 1, single buffered']
    #allocation10 [shape = 's32[1]{0}', space=sflag, size = 0x4, scoped, tag = 'scoped memory for tpu_custom_call.1']
    %12 = vsyncpa [#allocation3], 0
    %13 = vsyncpa [#allocation6], 0
    %14 = vsyncpa [#allocation4], 0
    %15 = vsyncpa [#allocation10], 0
    // Predicated region
    $region2: #{tpu_custom_call.1} parent=1 // pred_check
      _
    $region3: #{tpu_custom_call.1} parent=1 // pred_check_branch
      %17 = sbr.rel (0) target = $region5
    $region4: #{tpu_custom_call.1} parent=1 // pred_region
      %s19 = ssub.s32 32, 32
      %20 = vsyncadd [#allocation3], %s19
      %s22 = sshll.u32 [#allocation2], 4
      %s23 = int_to_ptr.vmem [resolvable:$true] %s22
      %25 = dma.hbm_to_vmem [thread:$0]  %s0, 32, %s23, [#allocation3]
    $region5: #{tpu_custom_call.1} parent=1 // pred_fallthru
      _
    // Predicated region
    $region6: #{tpu_custom_call.1} parent=1 // pred_check
      _
    $region7: #{tpu_custom_call.1} parent=1 // pred_check_branch
      %27 = sbr.rel (0) target = $region9
    $region8: #{tpu_custom_call.1} parent=1 // pred_region
      %s29 = ssub.s32 256, 256
      %30 = vsyncadd [#allocation6], %s29
      %s31 = sshll.u32 [#allocation5], 4
      %s32 = int_to_ptr.vmem [resolvable:$true] %s31
      %37 = dma.hbm_to_vmem [thread:$0]  %s1, 256, %s32, [#allocation6], 128, 128, 8
    $region9: #{tpu_custom_call.1} parent=1 // pred_fallthru
      _
    // Predicated region
    $region10: #{tpu_custom_call.1} parent=1 // pred_check
      _
    $region11: #{tpu_custom_call.1} parent=1 // pred_check_branch
      %39 = sbr.rel (0) target = $region13
    $region12: #{tpu_custom_call.1} parent=1 // pred_region
      %s41 = ssub.s32 512, 512
      %42 = vsyncadd [#allocation6], %s41
      %s43 = sshll.u32 [#allocation7], 4
      %s44 = int_to_ptr.vmem [resolvable:$true] %s43
      %49 = dma.hbm_to_vmem [thread:$0]  %s2, 512, %s44, [#allocation6], 128, 128, 8
    $region13: #{tpu_custom_call.1} parent=1 // pred_fallthru
      _
    // Predicated region
    $region14: #{tpu_custom_call.1} parent=1 // pred_check
      _
    $region15: #{tpu_custom_call.1} parent=1 // pred_check_branch
      %51 = sbr.rel (0) target = $region17
    $region16: #{tpu_custom_call.1} parent=1 // pred_region
      _
    $region17: #{tpu_custom_call.1} parent=1 // pred_fallthru
      _
    // Predicated region
    $region18: #{tpu_custom_call.1} parent=1 // pred_check
      _
    $region19: #{tpu_custom_call.1} parent=1 // pred_check_branch
      %53 = sbr.rel (0) target = $region21
    $region20: #{tpu_custom_call.1} parent=1 // pred_region
      _
    $region21: #{tpu_custom_call.1} parent=1 // pred_fallthru
      _
    // Predicated region
    $region22: #{tpu_custom_call.1} parent=1 // pred_check
      _
    $region23: #{tpu_custom_call.1} parent=1 // pred_check_branch
      %55 = sbr.rel (0) target = $region25
    $region24: #{tpu_custom_call.1} parent=1 // pred_region
      %56 = dma.done [#allocation3], 32
    $region25: #{tpu_custom_call.1} parent=1 // pred_fallthru
      _
    // Predicated region
    $region26: #{tpu_custom_call.1} parent=1 // pred_check
      _
    $region27: #{tpu_custom_call.1} parent=1 // pred_check_branch
      %58 = sbr.rel (0) target = $region29
    $region28: #{tpu_custom_call.1} parent=1 // pred_region
      %59 = dma.done [#allocation6], 256
    $region29: #{tpu_custom_call.1} parent=1 // pred_fallthru
      _
    // Predicated region
    $region30: #{tpu_custom_call.1} parent=1 // pred_check
      _
    $region31: #{tpu_custom_call.1} parent=1 // pred_check_branch
      %61 = sbr.rel (0) target = $region33
    $region32: #{tpu_custom_call.1} parent=1 // pred_region
      %62 = dma.done [#allocation6], 512
    $region33: #{tpu_custom_call.1} parent=1 // pred_fallthru
      _
    %v63 = vld [vmem:[#allocation5] sm:$0xff]
    %v64 = vld [vmem:[#allocation5 + $0x8] sm:$0xff]
    %v65 = vld [vmem:[#allocation7] sm:$0xff]
    %v66 = vld [vmem:[#allocation7 + $0x8] sm:$0xff]
    %v67 = vld [vmem:[#allocation7 + $0x10] sm:$0xff]
    %v68 = vld [vmem:[#allocation7 + $0x18] sm:$0xff]
    %v69 = vld [vmem:[%s3] sm:$0x1]
    %v71 = vlaneseq
    %v72 = vshrl.u32 %v71, 7
    %v73 = vsub.s32 0, %v72
    %v74 = vrot.slane %v69, %v73
    %vm76 = vcmask 261120
    %v78 = vsel %vm76, %v63, 0
    %v81 = vsel %vm76, %v64, 0
    %83 = vmatprep.subr.mxu0 0.0
    %84 = vmatpush1.msra.mxu0 %v65
    %85 = vmatprep.subr.mxu0 0.0
    %86 = vmatpush1.msra.mxu0 %v66
    %87 = vmatprep.subr.mxu0 0.0
    %88 = vmatpush1.msra.mxu0 %v67
    %89 = vmatprep.subr.mxu0 0.0
    %90 = vmatpush1.msra.mxu0 %v68
    %91 = vmatprep.subr.mxu0 0.0
    %92 = vmatpush1.msra.mxu0 0.0
    %93 = vmatprep.subr.mxu0 0.0
    %94 = vmatpush1.msra.mxu0 0.0
    %95 = vmatprep.subr.mxu0 0.0
    %96 = vmatpush1.msra.mxu0 0.0
    %97 = vmatprep.subr.mxu0 0.0
    %98 = vmatpush1.msra.mxu0 0.0
    %99 = vmatprep.subr.mxu0 0.0
    %100 = vmatpush1.msra.mxu0 0.0
    %101 = vmatprep.subr.mxu0 0.0
    %102 = vmatpush1.msra.mxu0 0.0
    %103 = vmatprep.subr.mxu0 0.0
    %104 = vmatpush1.msra.mxu0 0.0
    %105 = vmatprep.subr.mxu0 0.0
    %106 = vmatpush1.msra.mxu0 0.0
    %107 = vmatprep.subr.mxu0 0.0
    %108 = vmatpush1.msra.mxu0 0.0
    %109 = vmatprep.subr.mxu0 0.0
    %110 = vmatpush1.msra.mxu0 0.0
    %111 = vmatprep.subr.mxu0 0.0
    %112 = vmatpush1.msra.mxu0 0.0
    %113 = vmatprep.subr.mxu0 0.0
    %114 = vmatpush1.msra.mxu0 0.0
    %115 = vmatprep.subr.mxu0 0.0
    %116 = vmatpush1.msra.mxu0 0.0
    %117 = vmatprep.subr.mxu0 0.0
    %118 = vmatpush1.msra.mxu0 0.0
    %119 = vmatprep.subr.mxu0 0.0
    %120 = vmatpush1.msra.mxu0 0.0
    %121 = vmatprep.subr.mxu0 0.0
    %122 = vmatpush1.msra.mxu0 0.0
    %123 = vmatprep.subr.mxu0 0.0
    %124 = vmatpush1.msra.mxu0 0.0
    %125 = vmatprep.subr.mxu0 0.0
    %126 = vmatpush1.msra.mxu0 0.0
    %127 = vmatprep.subr.mxu0 0.0
    %128 = vmatpush1.msra.mxu0 0.0
    %129 = vmatprep.subr.mxu0 0.0
    %130 = vmatpush1.msra.mxu0 0.0
    %131 = vmatprep.subr.mxu0 0.0
    %132 = vmatpush1.msra.mxu0 0.0
    %133 = vmatprep.subr.mxu0 0.0
    %134 = vmatpush1.msra.mxu0 0.0
    %135 = vmatprep.subr.mxu0 0.0
    %136 = vmatpush1.msra.mxu0 0.0
    %137 = vmatprep.subr.mxu0 0.0
    %138 = vmatpush1.msra.mxu0 0.0
    %139 = vmatprep.subr.mxu0 0.0
    %140 = vmatpush1.msra.mxu0 0.0
    %141 = vmatprep.subr.mxu0 0.0
    %142 = vmatpush1.msra.mxu0 0.0
    %143 = vmatprep.subr.mxu0 0.0
    %144 = vmatpush1.msra.mxu0 0.0
    %145 = vmatprep.subr.mxu0 0.0
    %146 = vmatpush1.msra.mxu0 0.0
    %147 = vmatprep.mubr.f32.mxu0 0.0
    %148 = vmatmul.mubr.f32.gmra.mrb[0].mxu0 %v78
    %v149 = vpop.f32.mrb[0].mxu0
    %v150 = vadd.f32 %v74, %v149
    %v151 = vpop.f32.mrb[0].mxu0
    %152 = vmatprep.mubr.f32.mxu0 0.0
    %153 = vmatmul.mubr.f32.gmra.mrb[0].mxu0 %v81
    %v154 = vpop.f32.mrb[0].mxu0
    %v155 = vadd.f32 %v74, %v154
    %v156 = vpop.f32.mrb[0].mxu0
    %157 = vdwg.mxu0
    %158 = vst.msk [vmem:[#allocation8] sm:$0xff] %vm76, %v150
    %159 = vst.msk [vmem:[#allocation8 + $0x8] sm:$0xff] %vm76, %v155
    %v160 = vld [vmem:[#allocation2] sm:$0x3]
    %v163 = vunpack.c.l.s4 1966171168
    %v164 = vunpack.c.0.s8 %v163
    %v165 = vlaneseq
    %v166 = vshrl.u32 %v165, 7
    %v167 = vsub.s32 %v164, %v166
    %v168 = vrot.slane %v160, %v167
    %v169 = vcombine.high %v168, %v168
    %v171 = vunpack.c.l.s4 1966171168
    %v172 = vunpack.c.0.s8 %v171
    %v173 = vlaneseq
    %v174 = vshrl.u32 %v173, 7
    %v175 = vsub.s32 %v172, %v174
    %v176 = vrot.slane %v168, %v175
    %v178 = vunpack.c.l.s4 1966171168
    %v179 = vunpack.c.0.s8 %v178
    %v180 = vlaneseq
    %v181 = vshrl.u32 %v180, 7
    %v182 = vsub.s32 %v179, %v181
    %v183 = vrot.slane %v169, %v182
    %v184 = vlaneseq
    %v185 = vshrl.u32 %v184, 7
    %v186 = vsub.s32 0, %v185
    %v187 = vrot.slane %v176, %v186
    %v188 = vlaneseq
    %v189 = vshrl.u32 %v188, 7
    %v190 = vsub.s32 0, %v189
    %v191 = vrot.slane %v183, %v190
    %v194 = vadd.f32 %v150, %v187
    %v195 = vadd.f32 %v155, %v191
    %v196 = vtanh.pop %v194
    %v197 = vtanh.pop %v195
    %v198 = vld [vmem:[%s4] sm:$0x1]
    %v200 = vlaneseq
    %v201 = vshrl.u32 %v200, 7
    %v202 = vsub.s32 0, %v201
    %v203 = vrot.slane %v198, %v202
    %v205 = vmul.f32 %v196, %v203
    %v206 = vmul.f32 %v197, %v203
    %v207 = vsel %vm76, %v205, 0.0
    %208 = vadd.xlane.f32.xlu0 %v207
    %v209 = vpop.xlane.xlu0 %208
    %v210 = vsel %vm76, %v206, 0.0
    %211 = vadd.xlane.f32.xlu0 %v210
    %v212 = vpop.xlane.xlu0 %211
    %v215 = vlaneseq
    %v216 = vand.u32 %v215, 127
    %v217 = vlaneseq
    %v218 = vshrl.u32 %v217, 7
    %v219 = vsub.s32 %v216, %v218
    %v220 = vrot.slane %v209, %v219
    %v221 = vlaneseq
    %v222 = vshrl.u32 %v221, 7
    %v223 = vsub.s32 %v216, %v222
    %v224 = vrot.slane %v212, %v223
    %vm225 = vcmask 1041409
    %v226 = vsel %vm225, %v224, %v220
    %vm228 = vcmask 58368
    %229 = vst.msk [vmem:[#allocation9] sm:$0x3] %vm228, %v226
    // Predicated region
    $region34: #{tpu_custom_call.1} parent=1 // pred_check
      _
    $region35: #{tpu_custom_call.1} parent=1 // pred_check_branch
      %231 = sbr.rel (0) target = $region37
    $region36: #{tpu_custom_call.1} parent=1 // pred_region
      %s233 = ssub.s32 256, 256
      %234 = vsyncadd [#allocation4], %s233
      %s235 = sshll.u32 [#allocation8], 4
      %s236 = int_to_ptr.vmem [resolvable:$true] %s235
      %241 = dma.vmem_to_hbm [thread:$0]  %s236, 256, %s5, [#allocation4], 128, 128, 8
    $region37: #{tpu_custom_call.1} parent=1 // pred_fallthru
      _
    // Predicated region
    $region38: #{tpu_custom_call.1} parent=1 // pred_check
      _
    $region39: #{tpu_custom_call.1} parent=1 // pred_check_branch
      %243 = sbr.rel (0) target = $region41
    $region40: #{tpu_custom_call.1} parent=1 // pred_region
      %s245 = ssub.s32 32, 32
      %246 = vsyncadd [#allocation10], %s245
      %s248 = sshll.u32 [#allocation9], 4
      %s249 = int_to_ptr.vmem [resolvable:$true] %s248
      %251 = dma.vmem_to_hbm [thread:$0]  %s249, 32, %s6, [#allocation10]
    $region41: #{tpu_custom_call.1} parent=1 // pred_fallthru
      _
    // Predicated region
    $region42: #{tpu_custom_call.1} parent=1 // pred_check
      _
    $region43: #{tpu_custom_call.1} parent=1 // pred_check_branch
      %253 = sbr.rel (0) target = $region45
    $region44: #{tpu_custom_call.1} parent=1 // pred_region
      %254 = dma.done [#allocation4], 256
    $region45: #{tpu_custom_call.1} parent=1 // pred_fallthru
      _
    // Predicated region
    $region46: #{tpu_custom_call.1} parent=1 // pred_check
      _
    $region47: #{tpu_custom_call.1} parent=1 // pred_check_branch
      %256 = sbr.rel (0) target = $region49
    $region48: #{tpu_custom_call.1} parent=1 // pred_region
      %257 = dma.done [#allocation10], 32
    $region49: #{tpu_custom_call.1} parent=1 // pred_fallthru
      _
    %258 = vsyncpa [#allocation3], 1
    %259 = vsyncpa [#allocation6], 1
    %260 = vsyncpa [#allocation4], 1
    %261 = vsyncpa [#allocation10], 1

</llo_original>
